<compile_context>
chip_gen: v7x
topology: tpu7x:2x2x1
jax: 0.10.0
libtpu: 0.0.40
codegen_flags: <defaults>
</compile_context>

<pallas_src>
import functools

import numpy as np
import jax
import jax.numpy as jnp
from jax.experimental import pallas as pl
from jax.experimental.pallas import tpu as pltpu


def _round_up(x, m):
    return ((x + m - 1) // m) * m


def _cdiv(a, b):
    return -(-a // b)


def _default_act_dtype():
    """bf16 transcendentals on v6e/v7x (bf16 EUP path); f32 on v5e and older."""
    try:
        kind = jax.devices()[0].device_kind.lower()
    except Exception:
        return jnp.float32
    if any(tag in kind for tag in ("v6", "v7", "6e", "7x")):
        return jnp.bfloat16
    return jnp.float32


def _cdf_kernel(x_ref, w0_ref, b0_ref, w1_ref, b1_ref, w2_ref, b2_ref,
                epi_ref, gate_ref, out_ref, *, act_dtype):
    mm_dtype = w0_ref.dtype

    # ---- 3-layer MLP: MXU matmuls with f32 accumulation, tanh on the EUP ----
    h = jnp.dot(x_ref[...], w0_ref[...], preferred_element_type=jnp.float32) + b0_ref[...]
    h = jnp.tanh(h.astype(act_dtype)).astype(mm_dtype)
    h = jnp.dot(h, w1_ref[...], preferred_element_type=jnp.float32) + b1_ref[...]
    h = jnp.tanh(h.astype(act_dtype)).astype(mm_dtype)
    z = jnp.dot(h, w2_ref[...], preferred_element_type=jnp.float32) + b2_ref[...]

    # ---- stable softmax + shifted (exclusive) cumsum per packed segment ----
    # Subtracting the row-wide max is exact for every segment (per-row constant).
    z = z - jnp.max(z, axis=-1, keepdims=True)
    e = jnp.exp(z)

    # Single fused MXU push: [exclusive-cumsum numerator | per-segment denominator].
    ne = e.shape[-1]
    res = jnp.dot(e, epi_ref[...], preferred_element_type=jnp.float32)
    num = res[:, :ne]
    den = res[:, ne:]
    probs = num / den          # exact division: tiny epilogue, keeps the CDF clean

    # gate already carries the 1e-6 MSD pad folded into lane 0 of each segment
    out_ref[...] = jnp.maximum(gate_ref[...], probs)


def scheduled_softmax_cdf_forward(x, w0, b0, w1, b1, w2, b2, gate_mask, *,
                                  matmul_dtype=jnp.bfloat16,
                                  act_dtype=None,
                                  block_rows=8192):
    """Forward pass of ScheduledSoftmaxBasedCDFEstimator (msd_nonzero=True path).

    x: (B, d_in) float.  Weights (in, out) [transposed vs. torch nn.Linear],
    biases (out,), gate_mask (n_output,).  Returns (B, n_output) float32.
    """
    # TODO(synk): assign_nonzero_value_on_most_significant_digit=False branch
    # (n_output+1-way softmax, inclusive cumsum, no 1e-6 pad) is not implemented.
    if act_dtype is None:
        act_dtype = _default_act_dtype()

    B, d_in = x.shape
    n_hidden = w0.shape[1]
    n_out = w2.shape[1]

    MIN_SUBLANES = 16                                  # bf16 min tile is (16, 128)
    block_rows = max(MIN_SUBLANES, _round_up(int(block_rows), MIN_SUBLANES))

    # ---- batch packing factor: fill the 128 lanes of the hidden-layer vregs ----
    pack = max(1, 128 // max(n_hidden, 1))
    pack = min(pack, max(1, 128 // max(n_out, 1)))

    f32 = jnp.float32
    eye_p = jnp.eye(pack, dtype=f32)

    # block-diagonal weights: `pack` independent batch rows share one kernel row
    w0_blk = jnp.kron(eye_p, w0.astype(f32)).astype(matmul_dtype)
    w1_blk = jnp.kron(eye_p, w1.astype(f32)).astype(matmul_dtype)
    w2_blk = jnp.kron(eye_p, w2.astype(f32)).astype(matmul_dtype)
    b0_blk = jnp.tile(b0.astype(f32), pack).reshape(1, -1)
    b1_blk = jnp.tile(b1.astype(f32), pack).reshape(1, -1)
    b2_blk = jnp.tile(b2.astype(f32), pack).reshape(1, -1)

    # gate with the 1e-6 most-significant-digit pad folded into lane 0 of each segment
    gate_eff = gate_mask.astype(f32)
    gate_eff = gate_eff.at[0].set(jnp.maximum(gate_eff[0], jnp.float32(1e-6)))
    gate_blk = jnp.tile(gate_eff, pack).reshape(1, -1)

    # fused epilogue constant: [exclusive-cumsum matrix | segment-sum matrix]
    shift = jnp.triu(jnp.ones((n_out, n_out), f32), k=1)   # num[:, j] = sum_{i<j} e_i
    shift_blk = jnp.kron(eye_p, shift)
    seg_ones = jnp.kron(eye_p, jnp.ones((n_out, n_out), f32))
    epi = jnp.concatenate([shift_blk, seg_ones], axis=1)    # (pack*n_out, 2*pack*n_out)

    # ---- batch tiling: big tiles, >=2 grid steps when possible (v7x megacore) ----
    bp = _cdiv(B, pack)                                # packed rows needed
    n_steps = max(1, _cdiv(bp, block_rows))
    if n_steps == 1 and bp >= 2 * MIN_SUBLANES:
        n_steps = 2                                    # let both v7x TCs get work
    tbp = _round_up(_cdiv(bp, n_steps), MIN_SUBLANES)
    bp_pad = _round_up(bp, tbp)

    # ---- pack the batch; pad only when needed (pad+pack+cast fuse in XLA) ----
    rows_needed = bp_pad * pack
    x_src = x if rows_needed == B else jnp.pad(x, ((0, rows_needed - B), (0, 0)))
    x_packed = x_src.reshape(bp_pad, pack * d_in).astype(matmul_dtype)

    grid = (bp_pad // tbp,)

    def const_spec(a):
        return pl.BlockSpec(a.shape, lambda i: (0, 0))

    kernel = functools.partial(_cdf_kernel, act_dtype=act_dtype)
    out_packed = pl.pallas_call(
        kernel,
        out_shape=jax.ShapeDtypeStruct((bp_pad, pack * n_out), f32),
        grid=grid,
        in_specs=[
            pl.BlockSpec((tbp, pack * d_in), lambda i: (i, 0)),
            const_spec(w0_blk), const_spec(b0_blk),
            const_spec(w1_blk), const_spec(b1_blk),
            const_spec(w2_blk), const_spec(b2_blk),
            const_spec(epi), const_spec(gate_blk),
        ],
        out_specs=pl.BlockSpec((tbp, pack * n_out), lambda i: (i, 0)),
        compiler_params=pltpu.CompilerParams(dimension_semantics=("parallel",)),
    )(x_packed, w0_blk, b0_blk, w1_blk, b1_blk, w2_blk, b2_blk, epi, gate_blk)

    # undo the packing: row-major reshape, free outside the kernel
    return out_packed.reshape(bp_pad * pack, n_out)[:B]


# ---------------- parameter / gate setup + reference (plain JAX glue) ----------------

def init_params(key, n_dim_input, n_output, n_dim_hidden):
    """nn.Linear-style uniform init, deterministic.  W stored as (in, out)."""
    dims = [(n_dim_input, n_dim_hidden),
            (n_dim_hidden, n_dim_hidden),
            (n_dim_hidden, n_output)]
    params = []
    for (n_in, n_out) in dims:
        key, kw, kb = jax.random.split(key, 3)
        bound = 1.0 / float(np.sqrt(n_in))
        w = jax.random.uniform(kw, (n_in, n_out), jnp.float32, -bound, bound)
        b = jax.random.uniform(kb, (n_out,), jnp.float32, -bound, bound)
        params += [w, b]
    return params


def calc_gate_mask(n_output, gate_open_ratio=0.0, msd_nonzero=True, eps=0.01):
    offset = -0.5 if msd_nonzero else 0.5
    coef_gamma = 2.0 * float(np.log((1.0 - eps) / eps))
    coef_alpha = float(n_output - 1 if msd_nonzero else n_output)
    vec_n = jnp.arange(n_output, dtype=jnp.float32)
    return jax.nn.sigmoid(coef_gamma * (vec_n + offset - coef_alpha * gate_open_ratio))


def reference_forward(x, w0, b0, w1, b1, w2, b2, gate_mask):
    hp = jax.lax.Precision.HIGHEST
    h = jnp.tanh(jnp.dot(x, w0, precision=hp) + b0)
    h = jnp.tanh(jnp.dot(h, w1, precision=hp) + b1)
    z = jnp.dot(h, w2, precision=hp) + b2
    s = jax.nn.softmax(z, axis=-1)
    c = jnp.cumsum(s, axis=-1)[:, : z.shape[-1] - 1]
    pad = jnp.full((x.shape[0], 1), 1e-6, dtype=jnp.float32)
    probs = jnp.concatenate([pad, c], axis=-1)
    return jnp.maximum(gate_mask[None, :], probs)


if __name__ == "__main__":
    B = 64
    n_dim_input = 16
    n_output = 8
    n_dim_hidden = n_output * n_dim_input // 2   # module default: 64

    key = jax.random.PRNGKey(0)
    key, kx = jax.random.split(key)
    x = jax.random.normal(kx, (B, n_dim_input), dtype=jnp.float32)

    w0, b0, w1, b1, w2, b2 = init_params(key, n_dim_input, n_output, n_dim_hidden)
    gate_mask = calc_gate_mask(n_output, gate_open_ratio=0.25, msd_nonzero=True)

    ref = reference_forward(x, w0, b0, w1, b1, w2, b2, gate_mask)

    # f32 everywhere (accuracy baseline; tolerance covers default matmul-precision noise)
    out_f32 = scheduled_softmax_cdf_forward(
        x, w0, b0, w1, b1, w2, b2, gate_mask,
        matmul_dtype=jnp.float32, act_dtype=jnp.float32)
    out_f32 = jax.block_until_ready(out_f32)
    assert out_f32.shape == (B, n_output)
    assert jnp.allclose(out_f32, ref, rtol=1e-2, atol=5e-3), \
        float(jnp.max(jnp.abs(out_f32 - ref)))

    # performance default: bf16 MXU operands (f32 accumulation), bf16 tanh on v6e/v7x
    out_fast = scheduled_softmax_cdf_forward(x, w0, b0, w1, b1, w2, b2, gate_mask)
    out_fast = jax.block_until_ready(out_fast)
    assert out_fast.shape == (B, n_output)
    assert jnp.allclose(out_fast, ref, rtol=3e-2, atol=3e-2), \
        float(jnp.max(jnp.abs(out_fast - ref)))

    print("KERNEL_OK")
</pallas_src>

<mosaic_0001>
module attributes {stable_mosaic.version = 11 : i64} {
  func.func @_cdf_kernel(%arg0: i32, %arg1: memref<16x32xf32, #tpu.memory_space<vmem>>, %arg2: memref<32x128xf32, #tpu.memory_space<vmem>>, %arg3: memref<1x128xf32, #tpu.memory_space<vmem>>, %arg4: memref<128x128xf32, #tpu.memory_space<vmem>>, %arg5: memref<1x128xf32, #tpu.memory_space<vmem>>, %arg6: memref<128x16xf32, #tpu.memory_space<vmem>>, %arg7: memref<1x16xf32, #tpu.memory_space<vmem>>, %arg8: memref<16x32xf32, #tpu.memory_space<vmem>>, %arg9: memref<1x16xf32, #tpu.memory_space<vmem>>, %arg10: memref<16x16xf32, #tpu.memory_space<vmem>>) attributes {dimension_semantics = [#tpu.dimension_semantics<parallel>], iteration_bounds = array<i64: 2>, scalar_prefetch = 0 : i64, scratch_operands = 0 : i64, tpu.core_type = #tpu.core_type<tc>, window_params = [{transform_indices = @transform_0, window_bounds = array<i64: 16, 32>}, {pipeline_mode = #tpu.pipeline_mode<synchronous>, transform_indices = @transform_1, window_bounds = array<i64: 32, 128>}, {pipeline_mode = #tpu.pipeline_mode<synchronous>, transform_indices = @transform_2, window_bounds = array<i64: 1, 128>}, {pipeline_mode = #tpu.pipeline_mode<synchronous>, transform_indices = @transform_3, window_bounds = array<i64: 128, 128>}, {pipeline_mode = #tpu.pipeline_mode<synchronous>, transform_indices = @transform_4, window_bounds = array<i64: 1, 128>}, {pipeline_mode = #tpu.pipeline_mode<synchronous>, transform_indices = @transform_5, window_bounds = array<i64: 128, 16>}, {pipeline_mode = #tpu.pipeline_mode<synchronous>, transform_indices = @transform_6, window_bounds = array<i64: 1, 16>}, {pipeline_mode = #tpu.pipeline_mode<synchronous>, transform_indices = @transform_7, window_bounds = array<i64: 16, 32>}, {pipeline_mode = #tpu.pipeline_mode<synchronous>, transform_indices = @transform_8, window_bounds = array<i64: 1, 16>}, {transform_indices = @transform_9, window_bounds = array<i64: 16, 16>}]} {
    %c0 = arith.constant 0 : index
    %c0_0 = arith.constant 0 : index
    %0 = vector.load %arg1[%c0, %c0_0] : memref<16x32xf32, #tpu.memory_space<vmem>>, vector<16x32xf32>
    %c0_1 = arith.constant 0 : index
    %c0_2 = arith.constant 0 : index
    %1 = vector.load %arg2[%c0_1, %c0_2] : memref<32x128xf32, #tpu.memory_space<vmem>>, vector<32x128xf32>
    %cst = arith.constant dense<0.000000e+00> : vector<16x128xf32>
    %2 = tpu.matmul %0, %1, %cst {dimension_numbers = #tpu.dot_dimension_numbers<[1], [0], [0], [1], [0, 0, 1, 1], [], []>} : vector<16x32xf32>, vector<32x128xf32>, vector<16x128xf32> -> vector<16x128xf32>
    %c0_3 = arith.constant 0 : index
    %c0_4 = arith.constant 0 : index
    %3 = vector.load %arg3[%c0_3, %c0_4] : memref<1x128xf32, #tpu.memory_space<vmem>>, vector<1x128xf32>
    %4 = vector.broadcast %3 : vector<1x128xf32> to vector<16x128xf32>
    %5 = arith.addf %2, %4 : vector<16x128xf32>
    %6 = math.tanh %5 : vector<16x128xf32>
    %c0_5 = arith.constant 0 : index
    %c0_6 = arith.constant 0 : index
    %7 = vector.load %arg4[%c0_5, %c0_6] : memref<128x128xf32, #tpu.memory_space<vmem>>, vector<128x128xf32>
    %cst_7 = arith.constant dense<0.000000e+00> : vector<16x128xf32>
    %8 = tpu.matmul %6, %7, %cst_7 {dimension_numbers = #tpu.dot_dimension_numbers<[1], [0], [0], [1], [0, 0, 1, 1], [], []>} : vector<16x128xf32>, vector<128x128xf32>, vector<16x128xf32> -> vector<16x128xf32>
    %c0_8 = arith.constant 0 : index
    %c0_9 = arith.constant 0 : index
    %9 = vector.load %arg5[%c0_8, %c0_9] : memref<1x128xf32, #tpu.memory_space<vmem>>, vector<1x128xf32>
    %10 = vector.broadcast %9 : vector<1x128xf32> to vector<16x128xf32>
    %11 = arith.addf %8, %10 : vector<16x128xf32>
    %12 = math.tanh %11 : vector<16x128xf32>
    %c0_10 = arith.constant 0 : index
    %c0_11 = arith.constant 0 : index
    %13 = vector.load %arg6[%c0_10, %c0_11] : memref<128x16xf32, #tpu.memory_space<vmem>>, vector<128x16xf32>
    %cst_12 = arith.constant dense<0.000000e+00> : vector<16x16xf32>
    %14 = tpu.matmul %12, %13, %cst_12 {dimension_numbers = #tpu.dot_dimension_numbers<[1], [0], [0], [1], [0, 0, 1, 1], [], []>} : vector<16x128xf32>, vector<128x16xf32>, vector<16x16xf32> -> vector<16x16xf32>
    %c0_13 = arith.constant 0 : index
    %c0_14 = arith.constant 0 : index
    %15 = vector.load %arg7[%c0_13, %c0_14] : memref<1x16xf32, #tpu.memory_space<vmem>>, vector<1x16xf32>
    %16 = vector.broadcast %15 : vector<1x16xf32> to vector<16x16xf32>
    %17 = arith.addf %14, %16 : vector<16x16xf32>
    %cst_15 = arith.constant dense<0xFF800000> : vector<16xf32>
    %18 = vector.multi_reduction <maximumf>, %17, %cst_15 [1] : vector<16x16xf32> to vector<16xf32>
    %19 = vector.shape_cast %18 : vector<16xf32> to vector<16x1xf32>
    %20 = vector.broadcast %19 : vector<16x1xf32> to vector<16x16xf32>
    %21 = arith.subf %17, %20 : vector<16x16xf32>
    %22 = math.exp %21 : vector<16x16xf32>
    %c0_16 = arith.constant 0 : index
    %c0_17 = arith.constant 0 : index
    %23 = vector.load %arg8[%c0_16, %c0_17] : memref<16x32xf32, #tpu.memory_space<vmem>>, vector<16x32xf32>
    %cst_18 = arith.constant dense<0.000000e+00> : vector<16x32xf32>
    %24 = tpu.matmul %22, %23, %cst_18 {dimension_numbers = #tpu.dot_dimension_numbers<[1], [0], [0], [1], [0, 0, 1, 1], [], []>} : vector<16x16xf32>, vector<16x32xf32>, vector<16x32xf32> -> vector<16x32xf32>
    %25 = vector.extract_strided_slice %24 {offsets = [0, 0], sizes = [16, 16], strides = [1, 1]} : vector<16x32xf32> to vector<16x16xf32>
    %26 = vector.extract_strided_slice %24 {offsets = [0, 16], sizes = [16, 16], strides = [1, 1]} : vector<16x32xf32> to vector<16x16xf32>
    %27 = arith.divf %25, %26 : vector<16x16xf32>
    %c0_19 = arith.constant 0 : index
    %c0_20 = arith.constant 0 : index
    %28 = vector.load %arg9[%c0_19, %c0_20] : memref<1x16xf32, #tpu.memory_space<vmem>>, vector<1x16xf32>
    %29 = vector.broadcast %28 : vector<1x16xf32> to vector<16x16xf32>
    %30 = arith.maximumf %29, %27 : vector<16x16xf32>
    %c0_21 = arith.constant 0 : index
    %c0_22 = arith.constant 0 : index
    %31 = vector.load %arg10[%c0_21, %c0_22] : memref<16x16xf32, #tpu.memory_space<vmem>>, vector<16x16xf32>
    tpu.vector_store %arg10[%c0_21, %c0_22], %30 {strides = array<i32>} : memref<16x16xf32, #tpu.memory_space<vmem>>, vector<16x16xf32>,
    return
  }
  func.func @transform_0(%arg0: i32) -> (i32, i32) {
    %c0_i32 = arith.constant 0 : i32
    %c0_i32_0 = arith.constant 0 : i32
    return %arg0, %c0_i32 : i32, i32
  }
  func.func @transform_1(%arg0: i32) -> (i32, i32) {
    %c0_i32 = arith.constant 0 : i32
    %c0_i32_0 = arith.constant 0 : i32
    %c0_i32_1 = arith.constant 0 : i32
    return %c0_i32, %c0_i32_0 : i32, i32
  }
  func.func @transform_2(%arg0: i32) -> (i32, i32) {
    %c0_i32 = arith.constant 0 : i32
    %c0_i32_0 = arith.constant 0 : i32
    %c0_i32_1 = arith.constant 0 : i32
    return %c0_i32, %c0_i32_0 : i32, i32
  }
  func.func @transform_3(%arg0: i32) -> (i32, i32) {
    %c0_i32 = arith.constant 0 : i32
    %c0_i32_0 = arith.constant 0 : i32
    %c0_i32_1 = arith.constant 0 : i32
    return %c0_i32, %c0_i32_0 : i32, i32
  }
  func.func @transform_4(%arg0: i32) -> (i32, i32) {
    %c0_i32 = arith.constant 0 : i32
    %c0_i32_0 = arith.constant 0 : i32
    %c0_i32_1 = arith.constant 0 : i32
    return %c0_i32, %c0_i32_0 : i32, i32
  }
  func.func @transform_5(%arg0: i32) -> (i32, i32) {
    %c0_i32 = arith.constant 0 : i32
    %c0_i32_0 = arith.constant 0 : i32
    %c0_i32_1 = arith.constant 0 : i32
    return %c0_i32, %c0_i32_0 : i32, i32
  }
  func.func @transform_6(%arg0: i32) -> (i32, i32) {
    %c0_i32 = arith.constant 0 : i32
    %c0_i32_0 = arith.constant 0 : i32
    %c0_i32_1 = arith.constant 0 : i32
    return %c0_i32, %c0_i32_0 : i32, i32
  }
  func.func @transform_7(%arg0: i32) -> (i32, i32) {
    %c0_i32 = arith.constant 0 : i32
    %c0_i32_0 = arith.constant 0 : i32
    %c0_i32_1 = arith.constant 0 : i32
    return %c0_i32, %c0_i32_0 : i32, i32
  }
  func.func @transform_8(%arg0: i32) -> (i32, i32) {
    %c0_i32 = arith.constant 0 : i32
    %c0_i32_0 = arith.constant 0 : i32
    %c0_i32_1 = arith.constant 0 : i32
    return %c0_i32, %c0_i32_0 : i32, i32
  }
  func.func @transform_9(%arg0: i32) -> (i32, i32) {
    %c0_i32 = arith.constant 0 : i32
    %c0_i32_0 = arith.constant 0 : i32
    return %arg0, %c0_i32 : i32, i32
  }
}

</mosaic_0001>

<llo_original>
// kernel: tpu_custom_call.1
$region0: #{tpu_custom_call.1}
  #allocation0 [shape = 'u32[]', space=smem, size = 0x4, offset = 0x4, fixed_abs, tag = 'smem constant byte address 0x4 - core index']
  #allocation1 [shape = 'u32[144,128]{1,0:T(1,128)}', space=vmem, size = 0x12000, scoped, tag = 'internal scratch']
  %s0 = inlined_call_operand.hbm [shape: f32[32,32], index: 0, kind: input, shape index: {}]
  %s1 = inlined_call_operand.hbm [shape: f32[32,128], index: 1, kind: input, shape index: {}]
  %s2 = inlined_call_operand.vmem [shape: f32[1,128], index: 2, kind: input, shape index: {}]
  %s3 = inlined_call_operand.vmem [shape: f32[128,128], index: 3, kind: input, shape index: {}]
  %s4 = inlined_call_operand.vmem [shape: f32[1,128], index: 4, kind: input, shape index: {}]
  %s5 = inlined_call_operand.vmem [shape: f32[128,16], index: 5, kind: input, shape index: {}]
  %s6 = inlined_call_operand.vmem [shape: f32[1,16], index: 6, kind: input, shape index: {}]
  %s7 = inlined_call_operand.vmem [shape: f32[16,32], index: 7, kind: input, shape index: {}]
  %s8 = inlined_call_operand.vmem [shape: f32[1,16], index: 8, kind: input, shape index: {}]
  %s9 = inlined_call_operand.vmem [shape: f32[32,16], index: 9, kind: output, shape index: {}]
  %s10 = sld [smem:[#allocation0]]
  $region77: #{tpu_custom_call.1} parent=0
    _
  %s12 = ssub.s32 1, %s10
  %s13 = scalar_select 0, %s12, %s10
  $region1: #{tpu_custom_call.1} parent=0
    #allocation2 [shape = 'u8[16384]{0}', space=vmem, size = 0x4000, scoped, tag = 'input window, operand 0']
    #allocation3 [shape = 's32[2]{0}', space=sflag, size = 0x8, scoped, tag = 'scoped memory for tpu_custom_call.1']
    #allocation4 [shape = 'u8[16384]{0}', space=vmem, size = 0x4000, scoped, tag = 'input window, operand 1, single buffered']
    #allocation5 [shape = 's32[1]{0}', space=sflag, size = 0x4, scoped, tag = 'scoped memory for tpu_custom_call.1']
    %14 = vsyncpa [#allocation3], 0
    %s15 = scalar_lea.sflag [#allocation3], 1
    %16 = vsyncpa %s15, 0
    %17 = vsyncpa [#allocation5], 0
    loop: start=0, step=1, limit=4
    $region2: #{tpu_custom_call.1} parent=1 // loop_pre_header
      _
    $region3: #{tpu_custom_call.1} parent=1 // loop_header
      %s19 = sphi 0, %s23
      %p20 = scmp.ge.s32.totalorder %s19, 4
      %s29 = sphi 0, %s31
      %s32 = sphi 0, %s29
      %s33 = sphi 0, %s32
      %s49 = sphi 0, %s33
      %s53 = sphi 0, %s53
      %s55 = sphi 0, %s53
      %s56 = sphi 0, %s55
      %s70 = sphi 0, %s56
      %s74 = sphi 0, %s74
      %s76 = sphi 0, %s74
      %s77 = sphi 0, %s76
      %s91 = sphi 0, %s77
      %s95 = sphi 0, %s95
      %s97 = sphi 0, %s95
      %s98 = sphi 0, %s97
      %s112 = sphi 0, %s98
      %s116 = sphi 0, %s116
      %s118 = sphi 0, %s116
      %s119 = sphi 0, %s118
      %s133 = sphi 0, %s119
      %s137 = sphi 0, %s137
      %s139 = sphi 0, %s137
      %s140 = sphi 0, %s139
      %s154 = sphi 0, %s140
      %s158 = sphi 0, %s158
      %s160 = sphi 0, %s158
      %s161 = sphi 0, %s160
      %s175 = sphi 0, %s161
      %s179 = sphi 0, %s179
      %s181 = sphi 0, %s179
      %s182 = sphi 0, %s181
      %s196 = sphi 0, %s182
      %s200 = sphi 0, %s200
      %s202 = sphi 0, %s200
      %s203 = sphi 0, %s202
      %s217 = sphi 0, %s203
      %s223 = sphi 0, %s225
      %s226 = sphi 0, %s223
      %s227 = sphi 0, %s226
      %s243 = sphi 0, %s227
    $region4: #{tpu_custom_call.1} parent=1 // loop_header_branch
      %22 = sbr.rel (%p20) target = $region8
    $region5: #{tpu_custom_call.1} parent=1 // loop_body
      %s24 = ssub.s32 %s19, 1
      %s25 = ssub.s32 %s19, 2
      %s26 = sadd.s32 %s19, 1
      %s27 = ssub.s32 %s19, %s26
      %p28 = scmp.eq.s32.totalorder %s27, 0
      %s30 = sadd.s32 %s29, 1
      %s31 = scalar_select %p28, %s29, %s30
      %p34 = pneg %p28
      %p35 = scmp.eq.s32.totalorder %s19, 1
      %p36 = por %p34, %p35
      %p37 = scmp.ne.s32.totalorder %s29, %s32
      %p38 = scmp.eq.s32.totalorder %s19, 0
      %p39 = por %p37, %p38
      %p40 = scmp.ne.s32.totalorder %s29, %s32
      %p41 = scmp.eq.s32.totalorder %s24, 1
      %p42 = por %p40, %p41
      %p43 = scmp.ne.s32.totalorder %s32, %s33
      %p44 = scmp.eq.s32.totalorder %s24, 0
      %p45 = por %p43, %p44
      %p46 = scmp.ne.s32.totalorder %s32, %s33
      %p47 = scmp.eq.s32.totalorder %s25, 1
      %p48 = por %p46, %p47
      %p50 = scmp.ne.s32.totalorder %s33, %s49
      %p51 = scmp.eq.s32.totalorder %s25, 0
      %p52 = por %p50, %p51
      %s54 = sadd.s32 %s53, 1
      %p57 = scmp.eq.s32.totalorder %s19, 1
      %p58 = scmp.ne.s32.totalorder %s53, %s55
      %p59 = scmp.eq.s32.totalorder %s19, 0
      %p60 = por %p58, %p59
      %p61 = scmp.ne.s32.totalorder %s53, %s55
      %p62 = scmp.eq.s32.totalorder %s24, 1
      %p63 = por %p61, %p62
      %p64 = scmp.ne.s32.totalorder %s55, %s56
      %p65 = scmp.eq.s32.totalorder %s24, 0
      %p66 = por %p64, %p65
      %p67 = scmp.ne.s32.totalorder %s55, %s56
      %p68 = scmp.eq.s32.totalorder %s25, 1
      %p69 = por %p67, %p68
      %p71 = scmp.ne.s32.totalorder %s56, %s70
      %p72 = scmp.eq.s32.totalorder %s25, 0
      %p73 = por %p71, %p72
      %s75 = sadd.s32 %s74, 1
      %p78 = scmp.eq.s32.totalorder %s19, 1
      %p79 = scmp.ne.s32.totalorder %s74, %s76
      %p80 = scmp.eq.s32.totalorder %s19, 0
      %p81 = por %p79, %p80
      %p82 = scmp.ne.s32.totalorder %s74, %s76
      %p83 = scmp.eq.s32.totalorder %s24, 1
      %p84 = por %p82, %p83
      %p85 = scmp.ne.s32.totalorder %s76, %s77
      %p86 = scmp.eq.s32.totalorder %s24, 0
      %p87 = por %p85, %p86
      %p88 = scmp.ne.s32.totalorder %s76, %s77
      %p89 = scmp.eq.s32.totalorder %s25, 1
      %p90 = por %p88, %p89
      %p92 = scmp.ne.s32.totalorder %s77, %s91
      %p93 = scmp.eq.s32.totalorder %s25, 0
      %p94 = por %p92, %p93
      %s96 = sadd.s32 %s95, 1
      %p99 = scmp.eq.s32.totalorder %s19, 1
      %p100 = scmp.ne.s32.totalorder %s95, %s97
      %p101 = scmp.eq.s32.totalorder %s19, 0
      %p102 = por %p100, %p101
      %p103 = scmp.ne.s32.totalorder %s95, %s97
      %p104 = scmp.eq.s32.totalorder %s24, 1
      %p105 = por %p103, %p104
      %p106 = scmp.ne.s32.totalorder %s97, %s98
      %p107 = scmp.eq.s32.totalorder %s24, 0
      %p108 = por %p106, %p107
      %p109 = scmp.ne.s32.totalorder %s97, %s98
      %p110 = scmp.eq.s32.totalorder %s25, 1
      %p111 = por %p109, %p110
      %p113 = scmp.ne.s32.totalorder %s98, %s112
      %p114 = scmp.eq.s32.totalorder %s25, 0
      %p115 = por %p113, %p114
      %s117 = sadd.s32 %s116, 1
      %p120 = scmp.eq.s32.totalorder %s19, 1
      %p121 = scmp.ne.s32.totalorder %s116, %s118
      %p122 = scmp.eq.s32.totalorder %s19, 0
      %p123 = por %p121, %p122
      %p124 = scmp.ne.s32.totalorder %s116, %s118
      %p125 = scmp.eq.s32.totalorder %s24, 1
      %p126 = por %p124, %p125
      %p127 = scmp.ne.s32.totalorder %s118, %s119
      %p128 = scmp.eq.s32.totalorder %s24, 0
      %p129 = por %p127, %p128
      %p130 = scmp.ne.s32.totalorder %s118, %s119
      %p131 = scmp.eq.s32.totalorder %s25, 1
      %p132 = por %p130, %p131
      %p134 = scmp.ne.s32.totalorder %s119, %s133
      %p135 = scmp.eq.s32.totalorder %s25, 0
      %p136 = por %p134, %p135
      %s138 = sadd.s32 %s137, 1
      %p141 = scmp.eq.s32.totalorder %s19, 1
      %p142 = scmp.ne.s32.totalorder %s137, %s139
      %p143 = scmp.eq.s32.totalorder %s19, 0
      %p144 = por %p142, %p143
      %p145 = scmp.ne.s32.totalorder %s137, %s139
      %p146 = scmp.eq.s32.totalorder %s24, 1
      %p147 = por %p145, %p146
      %p148 = scmp.ne.s32.totalorder %s139, %s140
      %p149 = scmp.eq.s32.totalorder %s24, 0
      %p150 = por %p148, %p149
      %p151 = scmp.ne.s32.totalorder %s139, %s140
      %p152 = scmp.eq.s32.totalorder %s25, 1
      %p153 = por %p151, %p152
      %p155 = scmp.ne.s32.totalorder %s140, %s154
      %p156 = scmp.eq.s32.totalorder %s25, 0
      %p157 = por %p155, %p156
      %s159 = sadd.s32 %s158, 1
      %p162 = scmp.eq.s32.totalorder %s19, 1
      %p163 = scmp.ne.s32.totalorder %s158, %s160
      %p164 = scmp.eq.s32.totalorder %s19, 0
      %p165 = por %p163, %p164
      %p166 = scmp.ne.s32.totalorder %s158, %s160
      %p167 = scmp.eq.s32.totalorder %s24, 1
      %p168 = por %p166, %p167
      %p169 = scmp.ne.s32.totalorder %s160, %s161
      %p170 = scmp.eq.s32.totalorder %s24, 0
      %p171 = por %p169, %p170
      %p172 = scmp.ne.s32.totalorder %s160, %s161
      %p173 = scmp.eq.s32.totalorder %s25, 1
      %p174 = por %p172, %p173
      %p176 = scmp.ne.s32.totalorder %s161, %s175
      %p177 = scmp.eq.s32.totalorder %s25, 0
      %p178 = por %p176, %p177
      %s180 = sadd.s32 %s179, 1
      %p183 = scmp.eq.s32.totalorder %s19, 1
      %p184 = scmp.ne.s32.totalorder %s179, %s181
      %p185 = scmp.eq.s32.totalorder %s19, 0
      %p186 = por %p184, %p185
      %p187 = scmp.ne.s32.totalorder %s179, %s181
      %p188 = scmp.eq.s32.totalorder %s24, 1
      %p189 = por %p187, %p188
      %p190 = scmp.ne.s32.totalorder %s181, %s182
      %p191 = scmp.eq.s32.totalorder %s24, 0
      %p192 = por %p190, %p191
      %p193 = scmp.ne.s32.totalorder %s181, %s182
      %p194 = scmp.eq.s32.totalorder %s25, 1
      %p195 = por %p193, %p194
      %p197 = scmp.ne.s32.totalorder %s182, %s196
      %p198 = scmp.eq.s32.totalorder %s25, 0
      %p199 = por %p197, %p198
      %s201 = sadd.s32 %s200, 1
      %p204 = scmp.eq.s32.totalorder %s19, 1
      %p205 = scmp.ne.s32.totalorder %s200, %s202
      %p206 = scmp.eq.s32.totalorder %s19, 0
      %p207 = por %p205, %p206
      %p208 = scmp.ne.s32.totalorder %s200, %s202
      %p209 = scmp.eq.s32.totalorder %s24, 1
      %p210 = por %p208, %p209
      %p211 = scmp.ne.s32.totalorder %s202, %s203
      %p212 = scmp.eq.s32.totalorder %s24, 0
      %p213 = por %p211, %p212
      %p214 = scmp.ne.s32.totalorder %s202, %s203
      %p215 = scmp.eq.s32.totalorder %s25, 1
      %p216 = por %p214, %p215
      %p218 = scmp.ne.s32.totalorder %s203, %s217
      %p219 = scmp.eq.s32.totalorder %s25, 0
      %p220 = por %p218, %p219
      %s221 = ssub.s32 %s19, %s26
      %p222 = scmp.eq.s32.totalorder %s221, 0
      %s224 = sadd.s32 %s223, 1
      %s225 = scalar_select %p222, %s223, %s224
      %p228 = pneg %p222
      %p229 = scmp.eq.s32.totalorder %s19, 1
      %p230 = por %p228, %p229
      %p231 = scmp.ne.s32.totalorder %s223, %s226
      %p232 = scmp.eq.s32.totalorder %s19, 0
      %p233 = por %p231, %p232
      %p234 = scmp.ne.s32.totalorder %s223, %s226
      %p235 = scmp.eq.s32.totalorder %s24, 1
      %p236 = por %p234, %p235
      %p237 = scmp.ne.s32.totalorder %s226, %s227
      %p238 = scmp.eq.s32.totalorder %s24, 0
      %p239 = por %p237, %p238
      %p240 = scmp.ne.s32.totalorder %s226, %s227
      %p241 = scmp.eq.s32.totalorder %s25, 1
      %p242 = por %p240, %p241
      %p244 = scmp.ne.s32.totalorder %s227, %s243
      %p245 = scmp.eq.s32.totalorder %s25, 0
      %p246 = por %p244, %p245
      %p247 = scmp.le.s32.totalorder 1, %s19
      %p248 = scmp.lt.s32.totalorder %s19, 3
      %p249 = pnand %p247, %p248
      %p250 = pneg %p249
      // Predicated region
      $region9: #{tpu_custom_call.1} parent=5 // pred_check
        _
      $region10: #{tpu_custom_call.1} parent=5 // pred_check_branch
        %252 = sbr.rel (%p249) target = $region12
      $region11: #{tpu_custom_call.1} parent=5 // pred_region
        %s253 = ssub.s32 %s19, 1
        // Predicated region
        $region13: #{tpu_custom_call.1} parent=11 // pred_check
          %p254 = pneg %p66
        $region14: #{tpu_custom_call.1} parent=11 // pred_check_branch
          %256 = sbr.rel (%p254) target = $region16
        $region15: #{tpu_custom_call.1} parent=11 // pred_region
          %s258 = ssub.s32 512, 512
          %259 = vsyncadd [#allocation5], %s258
          %s260 = sshll.u32 [#allocation4], 4
          %s261 = int_to_ptr.vmem [resolvable:$true] %s260
          %266 = dma.hbm_to_vmem [thread:$0]  %s1, 512, %s261, [#allocation5], 128, 128, 8
        $region16: #{tpu_custom_call.1} parent=11 // pred_fallthru
          _
        // Predicated region
        $region17: #{tpu_custom_call.1} parent=11 // pred_check
          %p267 = pneg %p87
        $region18: #{tpu_custom_call.1} parent=11 // pred_check_branch
          %269 = sbr.rel (%p267) target = $region20
        $region19: #{tpu_custom_call.1} parent=11 // pred_region
          _
        $region20: #{tpu_custom_call.1} parent=11 // pred_fallthru
          _
        // Predicated region
        $region21: #{tpu_custom_call.1} parent=11 // pred_check
          %p270 = pneg %p108
        $region22: #{tpu_custom_call.1} parent=11 // pred_check_branch
          %272 = sbr.rel (%p270) target = $region24
        $region23: #{tpu_custom_call.1} parent=11 // pred_region
          _
        $region24: #{tpu_custom_call.1} parent=11 // pred_fallthru
          _
        // Predicated region
        $region25: #{tpu_custom_call.1} parent=11 // pred_check
          %p273 = pneg %p129
        $region26: #{tpu_custom_call.1} parent=11 // pred_check_branch
          %275 = sbr.rel (%p273) target = $region28
        $region27: #{tpu_custom_call.1} parent=11 // pred_region
          _
        $region28: #{tpu_custom_call.1} parent=11 // pred_fallthru
          _
        // Predicated region
        $region29: #{tpu_custom_call.1} parent=11 // pred_check
          %p276 = pneg %p150
        $region30: #{tpu_custom_call.1} parent=11 // pred_check_branch
          %278 = sbr.rel (%p276) target = $region32
        $region31: #{tpu_custom_call.1} parent=11 // pred_region
          _
        $region32: #{tpu_custom_call.1} parent=11 // pred_fallthru
          _
        // Predicated region
        $region33: #{tpu_custom_call.1} parent=11 // pred_check
          %p279 = pneg %p171
        $region34: #{tpu_custom_call.1} parent=11 // pred_check_branch
          %281 = sbr.rel (%p279) target = $region36
        $region35: #{tpu_custom_call.1} parent=11 // pred_region
          _
        $region36: #{tpu_custom_call.1} parent=11 // pred_fallthru
          _
        // Predicated region
        $region37: #{tpu_custom_call.1} parent=11 // pred_check
          %p282 = pneg %p192
        $region38: #{tpu_custom_call.1} parent=11 // pred_check_branch
          %284 = sbr.rel (%p282) target = $region40
        $region39: #{tpu_custom_call.1} parent=11 // pred_region
          _
        $region40: #{tpu_custom_call.1} parent=11 // pred_fallthru
          _
        // Predicated region
        $region41: #{tpu_custom_call.1} parent=11 // pred_check
          %p285 = pneg %p213
        $region42: #{tpu_custom_call.1} parent=11 // pred_check_branch
          %287 = sbr.rel (%p285) target = $region44
        $region43: #{tpu_custom_call.1} parent=11 // pred_region
          _
        $region44: #{tpu_custom_call.1} parent=11 // pred_fallthru
          _
      $region12: #{tpu_custom_call.1} parent=5 // pred_fallthru
        _
      %p288 = scmp.lt.s32.totalorder %s19, 2
      // Predicated region
      $region45: #{tpu_custom_call.1} parent=5 // pred_check
        %p289 = pneg %p288
      $region46: #{tpu_custom_call.1} parent=5 // pred_check_branch
        %291 = sbr.rel (%p289) target = $region48
      $region47: #{tpu_custom_call.1} parent=5 // pred_region
        // Predicated region
        $region49: #{tpu_custom_call.1} parent=47 // pred_check
          %p292 = pneg %p39
        $region50: #{tpu_custom_call.1} parent=47 // pred_check_branch
          %294 = sbr.rel (%p292) target = $region52
        $region51: #{tpu_custom_call.1} parent=47 // pred_region
          %s295 = sand.u32 %s29, 1
          %s296 = scalar_lea.sflag [#allocation3], %s295
          %s297 = sand.u32 %s29, 1
          %s298 = smul.addr %s297, 16
          %s299 = scalar_lea.vmem [#allocation2], %s298
          %s300 = smul.u32 2, %s19
          %s302 = ssub.s32 256, 256
          %303 = vsyncadd %s296, %s302
          %s304 = smul.addr %s300, 128
          %s305 = scalar_lea.hbm %s0, %s304
          %s306 = sshll.u32 %s299, 4
          %s307 = int_to_ptr.vmem [resolvable:$true] %s306
          %312 = dma.hbm_to_vmem [thread:$0]  %s305, 256, %s307, %s296, 128, 128, 8
        $region52: #{tpu_custom_call.1} parent=47 // pred_fallthru
          _
      $region48: #{tpu_custom_call.1} parent=5 // pred_fallthru
        _
      %p313 = scmp.le.s32.totalorder 1, %s19
      %p314 = scmp.lt.s32.totalorder %s19, 3
      %p315 = pnand %p313, %p314
      %p316 = pneg %p315
      // Predicated region
      $region53: #{tpu_custom_call.1} parent=5 // pred_check
        _
      $region54: #{tpu_custom_call.1} parent=5 // pred_check_branch
        %318 = sbr.rel (%p315) target = $region56
      $region55: #{tpu_custom_call.1} parent=5 // pred_region
        %s319 = ssub.s32 %s19, 1
        %s320 = sand.u32 %s32, 1
        %s321 = scalar_lea.sflag [#allocation3], %s320
        %s322 = sand.u32 %s32, 1
        %s323 = smul.addr %s322, 16
        %s324 = scalar_lea.vmem [#allocation2], %s323
        // Predicated region
        $region57: #{tpu_custom_call.1} parent=55 // pred_check
          %p325 = pneg %p45
        $region58: #{tpu_custom_call.1} parent=55 // pred_check_branch
          %327 = sbr.rel (%p325) target = $region60
        $region59: #{tpu_custom_call.1} parent=55 // pred_region
          %328 = dma.done %s321, 256
        $region60: #{tpu_custom_call.1} parent=55 // pred_fallthru
          _
        // Predicated region
        $region61: #{tpu_custom_call.1} parent=55 // pred_check
          %p329 = pneg %p66
        $region62: #{tpu_custom_call.1} parent=55 // pred_check_branch
          %331 = sbr.rel (%p329) target = $region64
        $region63: #{tpu_custom_call.1} parent=55 // pred_region
          %332 = dma.done [#allocation5], 512
        $region64: #{tpu_custom_call.1} parent=55 // pred_fallthru
          _
        %s333 = sand.u32 %s32, 1
        %s334 = scalar_lea.sflag [#allocation3], %s333
        %s335 = sand.u32 %s32, 1
        %s336 = smul.addr %s335, 16
        %s337 = scalar_lea.vmem [#allocation2], %s336
        %p338 = pneg %p45
        %p339 = pneg %p42
        %p340 = pneg %p66
        %p341 = pneg %p63
        %p342 = pneg %p87
        %p343 = pneg %p84
        %p344 = pneg %p108
        %p345 = pneg %p105
        %p346 = pneg %p129
        %p347 = pneg %p126
        %p348 = pneg %p150
        %p349 = pneg %p147
        %p350 = pneg %p171
        %p351 = pneg %p168
        %p352 = pneg %p192
        %p353 = pneg %p189
        %p354 = pneg %p213
        %p355 = pneg %p210
        %p356 = pneg %p239
        %p357 = pneg %p236
        %s358 = smul.u32 2, %s24
        %p359 = scmp.lt.s32.totalorder %s358, 3
        %s360 = scalar_select %p359, %s358, 3
        %s361 = smul.addr %s360, 8
        %s362 = scalar_lea.vmem %s9, %s361
        %s363 = smul.u32 2, %s24
        %s364 = smul.u32 2, %s24
        %p365 = scmp.lt.s32.totalorder %s364, 3
        %s366 = scalar_select %p365, %s364, 3
        %s367 = smul.addr %s366, 8
        %s368 = scalar_lea.vmem %s9, %s367
        %s369 = smul.u32 2, %s24
        %v370 = vld [vmem:[%s324] sm:$0xff]
        %v371 = vld [vmem:[%s324 + $0x8] sm:$0xff]
        %v372 = vld [vmem:[#allocation4] sm:$0xff]
        %v373 = vld [vmem:[#allocation4 + $0x8] sm:$0xff]
        %v374 = vld [vmem:[#allocation4 + $0x10] sm:$0xff]
        %v375 = vld [vmem:[#allocation4 + $0x18] sm:$0xff]
        %v376 = vld [vmem:[%s2] sm:$0x1]
        %v378 = vlaneseq
        %v379 = vshrl.u32 %v378, 7
        %v380 = vsub.s32 0, %v379
        %v381 = vrot.slane %v376, %v380
        %vm383 = vcmask 261120
        %v385 = vsel %vm383, %v370, 0
        %v388 = vsel %vm383, %v371, 0
        %390 = vmatprep.subr.mxu0 0.0
        %391 = vmatpush1.msra.mxu0 %v372
        %392 = vmatprep.subr.mxu0 0.0
        %393 = vmatpush1.msra.mxu0 %v373
        %394 = vmatprep.subr.mxu0 0.0
        %395 = vmatpush1.msra.mxu0 %v374
        %396 = vmatprep.subr.mxu0 0.0
        %397 = vmatpush1.msra.mxu0 %v375
        %398 = vmatprep.subr.mxu0 0.0
        %399 = vmatpush1.msra.mxu0 0.0
        %400 = vmatprep.subr.mxu0 0.0
        %401 = vmatpush1.msra.mxu0 0.0
        %402 = vmatprep.subr.mxu0 0.0
        %403 = vmatpush1.msra.mxu0 0.0
        %404 = vmatprep.subr.mxu0 0.0
        %405 = vmatpush1.msra.mxu0 0.0
        %406 = vmatprep.subr.mxu0 0.0
        %407 = vmatpush1.msra.mxu0 0.0
        %408 = vmatprep.subr.mxu0 0.0
        %409 = vmatpush1.msra.mxu0 0.0
        %410 = vmatprep.subr.mxu0 0.0
        %411 = vmatpush1.msra.mxu0 0.0
        %412 = vmatprep.subr.mxu0 0.0
        %413 = vmatpush1.msra.mxu0 0.0
        %414 = vmatprep.subr.mxu0 0.0
        %415 = vmatpush1.msra.mxu0 0.0
        %416 = vmatprep.subr.mxu0 0.0
        %417 = vmatpush1.msra.mxu0 0.0
        %418 = vmatprep.subr.mxu0 0.0
        %419 = vmatpush1.msra.mxu0 0.0
        %420 = vmatprep.subr.mxu0 0.0
        %421 = vmatpush1.msra.mxu0 0.0
        %422 = vmatprep.subr.mxu0 0.0
        %423 = vmatpush1.msra.mxu0 0.0
        %424 = vmatprep.subr.mxu0 0.0
        %425 = vmatpush1.msra.mxu0 0.0
        %426 = vmatprep.subr.mxu0 0.0
        %427 = vmatpush1.msra.mxu0 0.0
        %428 = vmatprep.subr.mxu0 0.0
        %429 = vmatpush1.msra.mxu0 0.0
        %430 = vmatprep.subr.mxu0 0.0
        %431 = vmatpush1.msra.mxu0 0.0
        %432 = vmatprep.subr.mxu0 0.0
        %433 = vmatpush1.msra.mxu0 0.0
        %434 = vmatprep.subr.mxu0 0.0
        %435 = vmatpush1.msra.mxu0 0.0
        %436 = vmatprep.subr.mxu0 0.0
        %437 = vmatpush1.msra.mxu0 0.0
        %438 = vmatprep.subr.mxu0 0.0
        %439 = vmatpush1.msra.mxu0 0.0
        %440 = vmatprep.subr.mxu0 0.0
        %441 = vmatpush1.msra.mxu0 0.0
        %442 = vmatprep.subr.mxu0 0.0
        %443 = vmatpush1.msra.mxu0 0.0
        %444 = vmatprep.subr.mxu0 0.0
        %445 = vmatpush1.msra.mxu0 0.0
        %446 = vmatprep.subr.mxu0 0.0
        %447 = vmatpush1.msra.mxu0 0.0
        %448 = vmatprep.subr.mxu0 0.0
        %449 = vmatpush1.msra.mxu0 0.0
        %450 = vmatprep.subr.mxu0 0.0
        %451 = vmatpush1.msra.mxu0 0.0
        %452 = vmatprep.subr.mxu0 0.0
        %453 = vmatpush1.msra.mxu0 0.0
        %454 = vmatprep.mubr.f32.mxu0 0.0
        %455 = vmatmul.mubr.f32.gmra.mrb[0].mxu0 %v385
        %v456 = vpop.f32.mrb[0].mxu0
        %v457 = vadd.f32 %v381, %v456
        %v458 = vpop.f32.mrb[0].mxu0
        %459 = vmatprep.mubr.f32.mxu0 0.0
        %460 = vmatmul.mubr.f32.gmra.mrb[0].mxu0 %v388
        %v461 = vpop.f32.mrb[0].mxu0
        %v462 = vadd.f32 %v381, %v461
        %v463 = vpop.f32.mrb[0].mxu0
        %464 = vdwg.mxu0
        %v465 = vtanh.pop %v457
        %v466 = vtanh.pop %v462
        %v467 = vld [vmem:[%s3] sm:$0xff]
        %v468 = vld [vmem:[%s3 + $0x8] sm:$0xff]
        %v469 = vld [vmem:[%s3 + $0x10] sm:$0xff]
        %v470 = vld [vmem:[%s3 + $0x18] sm:$0xff]
        %v471 = vld [vmem:[%s3 + $0x20] sm:$0xff]
        %v472 = vld [vmem:[%s3 + $0x28] sm:$0xff]
        %v473 = vld [vmem:[%s3 + $0x30] sm:$0xff]
        %v474 = vld [vmem:[%s3 + $0x38] sm:$0xff]
        %v475 = vld [vmem:[%s3 + $0x40] sm:$0xff]
        %v476 = vld [vmem:[%s3 + $0x48] sm:$0xff]
        %v477 = vld [vmem:[%s3 + $0x50] sm:$0xff]
        %v478 = vld [vmem:[%s3 + $0x58] sm:$0xff]
        %v479 = vld [vmem:[%s3 + $0x60] sm:$0xff]
        %v480 = vld [vmem:[%s3 + $0x68] sm:$0xff]
        %v481 = vld [vmem:[%s3 + $0x70] sm:$0xff]
        %v482 = vld [vmem:[%s3 + $0x78] sm:$0xff]
        %v483 = vld [vmem:[%s4] sm:$0x1]
        %v485 = vlaneseq
        %v486 = vshrl.u32 %v485, 7
        %v487 = vsub.s32 0, %v486
        %v488 = vrot.slane %v483, %v487
        %490 = vmatprep.subr.mxu0 0.0
        %491 = vmatpush1.msra.mxu0 %v467
        %492 = vmatprep.subr.mxu0 0.0
        %493 = vmatpush1.msra.mxu0 %v468
        %494 = vmatprep.subr.mxu0 0.0
        %495 = vmatpush1.msra.mxu0 %v469
        %496 = vmatprep.subr.mxu0 0.0
        %497 = vmatpush1.msra.mxu0 %v470
        %498 = vmatprep.subr.mxu0 0.0
        %499 = vmatpush1.msra.mxu0 %v471
        %500 = vmatprep.subr.mxu0 0.0
        %501 = vmatpush1.msra.mxu0 %v472
        %502 = vmatprep.subr.mxu0 0.0
        %503 = vmatpush1.msra.mxu0 %v473
        %504 = vmatprep.subr.mxu0 0.0
        %505 = vmatpush1.msra.mxu0 %v474
        %506 = vmatprep.subr.mxu0 0.0
        %507 = vmatpush1.msra.mxu0 %v475
        %508 = vmatprep.subr.mxu0 0.0
        %509 = vmatpush1.msra.mxu0 %v476
        %510 = vmatprep.subr.mxu0 0.0
        %511 = vmatpush1.msra.mxu0 %v477
        %512 = vmatprep.subr.mxu0 0.0
        %513 = vmatpush1.msra.mxu0 %v478
        %514 = vmatprep.subr.mxu0 0.0
        %515 = vmatpush1.msra.mxu0 %v479
        %516 = vmatprep.subr.mxu0 0.0
        %517 = vmatpush1.msra.mxu0 %v480
        %518 = vmatprep.subr.mxu0 0.0
        %519 = vmatpush1.msra.mxu0 %v481
        %520 = vmatprep.subr.mxu0 0.0
        %521 = vmatpush1.msra.mxu0 %v482
        %522 = vmatprep.subr.mxu0 0.0
        %523 = vmatpush1.msra.mxu0 0.0
        %524 = vmatprep.subr.mxu0 0.0
        %525 = vmatpush1.msra.mxu0 0.0
        %526 = vmatprep.subr.mxu0 0.0
        %527 = vmatpush1.msra.mxu0 0.0
        %528 = vmatprep.subr.mxu0 0.0
        %529 = vmatpush1.msra.mxu0 0.0
        %530 = vmatprep.subr.mxu0 0.0
        %531 = vmatpush1.msra.mxu0 0.0
        %532 = vmatprep.subr.mxu0 0.0
        %533 = vmatpush1.msra.mxu0 0.0
        %534 = vmatprep.subr.mxu0 0.0
        %535 = vmatpush1.msra.mxu0 0.0
        %536 = vmatprep.subr.mxu0 0.0
        %537 = vmatpush1.msra.mxu0 0.0
        %538 = vmatprep.subr.mxu0 0.0
        %539 = vmatpush1.msra.mxu0 0.0
        %540 = vmatprep.subr.mxu0 0.0
        %541 = vmatpush1.msra.mxu0 0.0
        %542 = vmatprep.subr.mxu0 0.0
        %543 = vmatpush1.msra.mxu0 0.0
        %544 = vmatprep.subr.mxu0 0.0
        %545 = vmatpush1.msra.mxu0 0.0
        %546 = vmatprep.subr.mxu0 0.0
        %547 = vmatpush1.msra.mxu0 0.0
        %548 = vmatprep.subr.mxu0 0.0
        %549 = vmatpush1.msra.mxu0 0.0
        %550 = vmatprep.subr.mxu0 0.0
        %551 = vmatpush1.msra.mxu0 0.0
        %552 = vmatprep.subr.mxu0 0.0
        %553 = vmatpush1.msra.mxu0 0.0
        %554 = vmatprep.mubr.f32.mxu0 0.0
        %555 = vmatmul.mubr.f32.gmra.mrb[0].mxu0 %v465
        %v556 = vpop.f32.mrb[0].mxu0
        %v557 = vadd.f32 %v488, %v556
        %v558 = vpop.f32.mrb[0].mxu0
        %559 = vmatprep.mubr.f32.mxu0 0.0
        %560 = vmatmul.mubr.f32.gmra.mrb[0].mxu0 %v466
        %v561 = vpop.f32.mrb[0].mxu0
        %v562 = vadd.f32 %v488, %v561
        %v563 = vpop.f32.mrb[0].mxu0
        %564 = vdwg.mxu0
        %v565 = vtanh.pop %v557
        %v566 = vtanh.pop %v562
        %v567 = vld [vmem:[%s5] sm:$0xff]
        %v568 = vld [vmem:[%s5 + $0x8] sm:$0xff]
        %v569 = vld [vmem:[%s5 + $0x10] sm:$0xff]
        %v570 = vld [vmem:[%s5 + $0x18] sm:$0xff]
        %v571 = vld [vmem:[%s5 + $0x20] sm:$0xff]
        %v572 = vld [vmem:[%s5 + $0x28] sm:$0xff]
        %v573 = vld [vmem:[%s5 + $0x30] sm:$0xff]
        %v574 = vld [vmem:[%s5 + $0x38] sm:$0xff]
        %v575 = vld [vmem:[%s5 + $0x40] sm:$0xff]
        %v576 = vld [vmem:[%s5 + $0x48] sm:$0xff]
        %v577 = vld [vmem:[%s5 + $0x50] sm:$0xff]
        %v578 = vld [vmem:[%s5 + $0x58] sm:$0xff]
        %v579 = vld [vmem:[%s5 + $0x60] sm:$0xff]
        %v580 = vld [vmem:[%s5 + $0x68] sm:$0xff]
        %v581 = vld [vmem:[%s5 + $0x70] sm:$0xff]
        %v582 = vld [vmem:[%s5 + $0x78] sm:$0xff]
        %v583 = vld [vmem:[%s6] sm:$0x1]
        %v585 = vlaneseq
        %v586 = vshrl.u32 %v585, 7
        %v587 = vsub.s32 0, %v586
        %v588 = vrot.slane %v583, %v587
        %590 = vmatprep.subr.mxu0 0.0
        %591 = vmatpush1.msra.mxu0 %v567
        %592 = vmatprep.subr.mxu0 0.0
        %593 = vmatpush1.msra.mxu0 %v568
        %594 = vmatprep.subr.mxu0 0.0
        %595 = vmatpush1.msra.mxu0 %v569
        %596 = vmatprep.subr.mxu0 0.0
        %597 = vmatpush1.msra.mxu0 %v570
        %598 = vmatprep.subr.mxu0 0.0
        %599 = vmatpush1.msra.mxu0 %v571
        %600 = vmatprep.subr.mxu0 0.0
        %601 = vmatpush1.msra.mxu0 %v572
        %602 = vmatprep.subr.mxu0 0.0
        %603 = vmatpush1.msra.mxu0 %v573
        %604 = vmatprep.subr.mxu0 0.0
        %605 = vmatpush1.msra.mxu0 %v574
        %606 = vmatprep.subr.mxu0 0.0
        %607 = vmatpush1.msra.mxu0 %v575
        %608 = vmatprep.subr.mxu0 0.0
        %609 = vmatpush1.msra.mxu0 %v576
        %610 = vmatprep.subr.mxu0 0.0
        %611 = vmatpush1.msra.mxu0 %v577
        %612 = vmatprep.subr.mxu0 0.0
        %613 = vmatpush1.msra.mxu0 %v578
        %614 = vmatprep.subr.mxu0 0.0
        %615 = vmatpush1.msra.mxu0 %v579
        %616 = vmatprep.subr.mxu0 0.0
        %617 = vmatpush1.msra.mxu0 %v580
        %618 = vmatprep.subr.mxu0 0.0
        %619 = vmatpush1.msra.mxu0 %v581
        %620 = vmatprep.subr.mxu0 0.0
        %621 = vmatpush1.msra.mxu0 %v582
        %622 = vmatprep.subr.mxu0 0.0
        %623 = vmatpush1.msra.mxu0 0.0
        %624 = vmatprep.subr.mxu0 0.0
        %625 = vmatpush1.msra.mxu0 0.0
        %626 = vmatprep.subr.mxu0 0.0
        %627 = vmatpush1.msra.mxu0 0.0
        %628 = vmatprep.subr.mxu0 0.0
        %629 = vmatpush1.msra.mxu0 0.0
        %630 = vmatprep.subr.mxu0 0.0
        %631 = vmatpush1.msra.mxu0 0.0
        %632 = vmatprep.subr.mxu0 0.0
        %633 = vmatpush1.msra.mxu0 0.0
        %634 = vmatprep.subr.mxu0 0.0
        %635 = vmatpush1.msra.mxu0 0.0
        %636 = vmatprep.subr.mxu0 0.0
        %637 = vmatpush1.msra.mxu0 0.0
        %638 = vmatprep.subr.mxu0 0.0
        %639 = vmatpush1.msra.mxu0 0.0
        %640 = vmatprep.subr.mxu0 0.0
        %641 = vmatpush1.msra.mxu0 0.0
        %642 = vmatprep.subr.mxu0 0.0
        %643 = vmatpush1.msra.mxu0 0.0
        %644 = vmatprep.subr.mxu0 0.0
        %645 = vmatpush1.msra.mxu0 0.0
        %646 = vmatprep.subr.mxu0 0.0
        %647 = vmatpush1.msra.mxu0 0.0
        %648 = vmatprep.subr.mxu0 0.0
        %649 = vmatpush1.msra.mxu0 0.0
        %650 = vmatprep.subr.mxu0 0.0
        %651 = vmatpush1.msra.mxu0 0.0
        %652 = vmatprep.subr.mxu0 0.0
        %653 = vmatpush1.msra.mxu0 0.0
        %654 = vmatprep.mubr.f32.mxu0 0.0
        %655 = vmatmul.mubr.f32.gmra.mrb[0].mxu0 %v565
        %v656 = vpop.f32.mrb[0].mxu0
        %v657 = vadd.f32 %v588, %v656
        %v658 = vpop.f32.mrb[0].mxu0
        %659 = vmatprep.mubr.f32.mxu0 0.0
        %660 = vmatmul.mubr.f32.gmra.mrb[0].mxu0 %v566
        %v661 = vpop.f32.mrb[0].mxu0
        %v662 = vadd.f32 %v588, %v661
        %v663 = vpop.f32.mrb[0].mxu0
        %664 = vdwg.mxu0
        %vm665 = vcmask 130048
        %v666 = vsel %vm665, %v657, -inf
        %667 = vmax.xlane.f32.xlu0 %v666
        %v668 = vpop.xlane.xlu0 %667
        %v669 = vsel %vm665, %v662, -inf
        %670 = vmax.xlane.f32.xlu0 %v669
        %v671 = vpop.xlane.xlu0 %670
        %v672 = vsub.f32 %v657, %v668
        %v673 = vsub.f32 %v662, %v671
        %v674 = vmul.f32 %v672, 1.442695
        %v675 = vpow.pop %v674
        %v676 = vmul.f32 %v673, 1.442695
        %v677 = vpow.pop %v676
        %v678 = vld [vmem:[%s7] sm:$0xff]
        %v679 = vld [vmem:[%s7 + $0x8] sm:$0xff]
        %v681 = vsel %vm665, %v675, 0
        %v684 = vsel %vm665, %v677, 0
        %686 = vmatprep.subr.mxu0 0.0
        %687 = vmatpush1.msra.mxu0 %v678
        %688 = vmatprep.subr.mxu0 0.0
        %689 = vmatpush1.msra.mxu0 %v679
        %690 = vmatprep.subr.mxu0 0.0
        %691 = vmatpush1.msra.mxu0 0.0
        %692 = vmatprep.subr.mxu0 0.0
        %693 = vmatpush1.msra.mxu0 0.0
        %694 = vmatprep.subr.mxu0 0.0
        %695 = vmatpush1.msra.mxu0 0.0
        %696 = vmatprep.subr.mxu0 0.0
        %697 = vmatpush1.msra.mxu0 0.0
        %698 = vmatprep.subr.mxu0 0.0
        %699 = vmatpush1.msra.mxu0 0.0
        %700 = vmatprep.subr.mxu0 0.0
        %701 = vmatpush1.msra.mxu0 0.0
        %702 = vmatprep.subr.mxu0 0.0
        %703 = vmatpush1.msra.mxu0 0.0
        %704 = vmatprep.subr.mxu0 0.0
        %705 = vmatpush1.msra.mxu0 0.0
        %706 = vmatprep.subr.mxu0 0.0
        %707 = vmatpush1.msra.mxu0 0.0
        %708 = vmatprep.subr.mxu0 0.0
        %709 = vmatpush1.msra.mxu0 0.0
        %710 = vmatprep.subr.mxu0 0.0
        %711 = vmatpush1.msra.mxu0 0.0
        %712 = vmatprep.subr.mxu0 0.0
        %713 = vmatpush1.msra.mxu0 0.0
        %714 = vmatprep.subr.mxu0 0.0
        %715 = vmatpush1.msra.mxu0 0.0
        %716 = vmatprep.subr.mxu0 0.0
        %717 = vmatpush1.msra.mxu0 0.0
        %718 = vmatprep.subr.mxu0 0.0
        %719 = vmatpush1.msra.mxu0 0.0
        %720 = vmatprep.subr.mxu0 0.0
        %721 = vmatpush1.msra.mxu0 0.0
        %722 = vmatprep.subr.mxu0 0.0
        %723 = vmatpush1.msra.mxu0 0.0
        %724 = vmatprep.subr.mxu0 0.0
        %725 = vmatpush1.msra.mxu0 0.0
        %726 = vmatprep.subr.mxu0 0.0
        %727 = vmatpush1.msra.mxu0 0.0
        %728 = vmatprep.subr.mxu0 0.0
        %729 = vmatpush1.msra.mxu0 0.0
        %730 = vmatprep.subr.mxu0 0.0
        %731 = vmatpush1.msra.mxu0 0.0
        %732 = vmatprep.subr.mxu0 0.0
        %733 = vmatpush1.msra.mxu0 0.0
        %734 = vmatprep.subr.mxu0 0.0
        %735 = vmatpush1.msra.mxu0 0.0
        %736 = vmatprep.subr.mxu0 0.0
        %737 = vmatpush1.msra.mxu0 0.0
        %738 = vmatprep.subr.mxu0 0.0
        %739 = vmatpush1.msra.mxu0 0.0
        %740 = vmatprep.subr.mxu0 0.0
        %741 = vmatpush1.msra.mxu0 0.0
        %742 = vmatprep.subr.mxu0 0.0
        %743 = vmatpush1.msra.mxu0 0.0
        %744 = vmatprep.subr.mxu0 0.0
        %745 = vmatpush1.msra.mxu0 0.0
        %746 = vmatprep.subr.mxu0 0.0
        %747 = vmatpush1.msra.mxu0 0.0
        %748 = vmatprep.subr.mxu0 0.0
        %749 = vmatpush1.msra.mxu0 0.0
        %750 = vmatprep.mubr.f32.mxu0 0.0
        %751 = vmatmul.mubr.f32.gmra.mrb[0].mxu0 %v681
        %v752 = vpop.f32.mrb[0].mxu0
        %v753 = vadd.f32 0.0, %v752
        %v754 = vpop.f32.mrb[0].mxu0
        %755 = vmatprep.mubr.f32.mxu0 0.0
        %756 = vmatmul.mubr.f32.gmra.mrb[0].mxu0 %v684
        %v757 = vpop.f32.mrb[0].mxu0
        %v758 = vadd.f32 0.0, %v757
        %v759 = vpop.f32.mrb[0].mxu0
        %760 = vdwg.mxu0
        %763 = vrot.lane.b32.xlu0 %v753, 112
        %v764 = vpop.permute.xlu0 %763
        %765 = vrot.lane.b32.xlu0 %v758, 112
        %v766 = vpop.permute.xlu0 %765
        %v769 = vrcp.pop %v764
        %v770 = vmul.f32 %v753, %v769
        %v771 = vrcp.pop %v766
        %v772 = vmul.f32 %v758, %v771
        %v773 = vld [vmem:[%s8] sm:$0x1]
        %v775 = vlaneseq
        %v776 = vshrl.u32 %v775, 7
        %v777 = vsub.s32 0, %v776
        %v778 = vrot.slane %v773, %v777
        %v780 = vmax.f32 %v778, %v770
        %v781 = vmax.f32 %v778, %v772
        %782 = vst.msk [vmem:[%s368] sm:$0xff] %vm665, %v780
        %783 = vst.msk [vmem:[%s368 + $0x8] sm:$0xff] %vm665, %v781
        %s784 = smul.u32 2, %s24
        %p785 = scmp.lt.s32.totalorder %s784, 3
        %s786 = scalar_select %p785, %s784, 3
        %s787 = smul.addr %s786, 8
        %s788 = scalar_lea.vmem %s9, %s787
        // Predicated region
        $region65: #{tpu_custom_call.1} parent=55 // pred_check
          %p789 = pneg %p236
        $region66: #{tpu_custom_call.1} parent=55 // pred_check_branch
          %791 = sbr.rel (%p789) target = $region68
        $region67: #{tpu_custom_call.1} parent=55 // pred_region
          %s792 = smul.u32 2, %s24
        $region68: #{tpu_custom_call.1} parent=55 // pred_fallthru
          _
      $region56: #{tpu_custom_call.1} parent=5 // pred_fallthru
        _
      %p793 = scmp.le.s32.totalorder 2, %s19
      // Predicated region
      $region69: #{tpu_custom_call.1} parent=5 // pred_check
        %p794 = pneg %p793
      $region70: #{tpu_custom_call.1} parent=5 // pred_check_branch
        %796 = sbr.rel (%p794) target = $region72
      $region71: #{tpu_custom_call.1} parent=5 // pred_region
        %s797 = ssub.s32 %s19, 2
        // Predicated region
        $region73: #{tpu_custom_call.1} parent=71 // pred_check
          %p798 = pneg %p242
        $region74: #{tpu_custom_call.1} parent=71 // pred_check_branch
          %800 = sbr.rel (%p798) target = $region76
        $region75: #{tpu_custom_call.1} parent=71 // pred_region
          %s801 = smul.u32 2, %s25
          %p802 = scmp.lt.s32.totalorder %s801, 3
          %s803 = scalar_select %p802, %s801, 3
          %s804 = smul.addr %s803, 8
          %s805 = scalar_lea.vmem %s9, %s804
        $region76: #{tpu_custom_call.1} parent=71 // pred_fallthru
          _
      $region72: #{tpu_custom_call.1} parent=5 // pred_fallthru
        _
    $region6: #{tpu_custom_call.1} parent=1 // loop_footer
      %s23 = sadd.s32 1, %s19
    $region7: #{tpu_custom_call.1} parent=1 // loop_footer_branch
      %18 = sbr.rel target = $region3
    $region8: #{tpu_custom_call.1} parent=1 // loop_exit
      _
    %806 = vsyncpa [#allocation3], 1
    %s807 = scalar_lea.sflag [#allocation3], 1
    %808 = vsyncpa %s807, 1
    %809 = vsyncpa [#allocation5], 1

</llo_original>
